<compile_context>
chip_gen: v6e
topology: v6e:2x2x1
jax: 0.10.0
libtpu: 0.0.40
codegen_flags: <defaults>
</compile_context>

<pallas_src>
import jax
import jax.numpy as jnp
from jax.experimental import pallas as pl
from jax.experimental.pallas import tpu as pltpu

_LANES = 128


def _linear_kernel(x_ref, w_ref, b_ref, o_ref):
    # x_ref: (tm, Din)          -- streamed batch tile
    # w_ref: (Din, Dout_pad)    -- resident, lane-dense, MXU-native orientation
    # b_ref: (1, Dout_pad)      -- resident bias row
    # o_ref: (tm, Dout)         -- UNPADDED output tile (Dout = num_classes)
    acc = jnp.dot(x_ref[...], w_ref[...], preferred_element_type=jnp.float32)
    acc = acc + b_ref[...]
    dout = o_ref.shape[-1]
    o_ref[...] = acc[:, :dout].astype(o_ref.dtype)


def pad_params(weight, bias):
    """One-time parameter prep (hoisted out of the per-call path).

    weight: (num_classes, input_size)  -- PyTorch nn.Linear layout
    bias:   (num_classes,)
    returns w_pad (input_size, Dout_pad), b_pad (1, Dout_pad)
    """
    dout, din = weight.shape
    dout_pad = max(_LANES, pl.cdiv(dout, _LANES) * _LANES)
    w_pad = jnp.zeros((din, dout_pad), dtype=weight.dtype).at[:, :dout].set(weight.T)
    b_pad = jnp.zeros((1, dout_pad), dtype=bias.dtype).at[0, :dout].set(bias)
    return w_pad, b_pad


def simple_classifier_forward(x, w_pad, b_pad, num_classes, *, block_m=2048):
    """Equivalent of PyTorch SimpleClassifier.forward: y = x @ weight.T + bias.

    x:      (B, input_size)
    w_pad:  (input_size, Dout_pad)  from pad_params
    b_pad:  (1, Dout_pad)           from pad_params
    returns (B, num_classes)
    """
    B, Din = x.shape
    Dout = num_classes
    Dout_pad = w_pad.shape[1]

    # Batch tile: as large as practical (amortize ~0.35 us/step overhead), but
    # ensure >=2 grid steps when the batch allows so the "parallel" axis can
    # shard across both TensorCores on v7x.  tm must be a multiple of 8 unless
    # it equals B (the (8,128) BlockSpec rule).
    tm = min(block_m, B)
    if tm == B and B >= 16:
        tm = ((pl.cdiv(B, 2) + 7) // 8) * 8
    grid_m = pl.cdiv(B, tm)

    itemsize = jnp.dtype(x.dtype).itemsize
    cost = pl.CostEstimate(
        flops=2 * B * Din * Dout,
        transcendentals=0,
        bytes_accessed=(x.size + w_pad.size + b_pad.size + B * Dout) * itemsize,
    )

    return pl.pallas_call(
        _linear_kernel,
        out_shape=jax.ShapeDtypeStruct((B, Dout), x.dtype),
        grid=(grid_m,),
        in_specs=[
            pl.BlockSpec((tm, Din), lambda i: (i, 0)),           # stream batch tiles
            pl.BlockSpec((Din, Dout_pad), lambda i: (0, 0)),     # weight resident
            pl.BlockSpec((1, Dout_pad), lambda i: (0, 0)),       # bias resident
        ],
        out_specs=pl.BlockSpec((tm, Dout), lambda i: (i, 0)),    # unpadded, Dout-wide
        compiler_params=pltpu.CompilerParams(
            dimension_semantics=("parallel",),  # independent batch tiles -> megacore-shardable
        ),
        cost_estimate=cost,
    )(x, w_pad, b_pad)
    # TODO(synk): if a downstream softmax/argmax/loss exists, fuse it here instead of
    # round-tripping (B, Dout) logits through HBM — that is the only larger win left.


if __name__ == "__main__":
    key = jax.random.PRNGKey(0)
    kx, kw, kb = jax.random.split(key, 3)

    input_size = 5
    num_classes = 5
    batch = 64  # small, but enough to exercise a multi-step (2-tile) grid

    # Deterministic synthetic parameters (same shapes as nn.Linear(5, 5)).
    x = jax.random.normal(kx, (batch, input_size), dtype=jnp.float32)
    weight = jax.random.normal(kw, (num_classes, input_size), dtype=jnp.float32) * 0.1
    bias = jax.random.normal(kb, (num_classes,), dtype=jnp.float32) * 0.1

    # One-time param prep (hoisted out of the per-call path).
    w_pad, b_pad = pad_params(weight, bias)

    fwd = jax.jit(simple_classifier_forward, static_argnames=("num_classes", "block_m"))
    out = fwd(x, w_pad, b_pad, num_classes=num_classes)
    jax.block_until_ready(out)

    # Cross-check against plain-JAX reference of the PyTorch semantics.
    ref = x @ weight.T + bias
    assert out.shape == (batch, num_classes)
    assert jnp.allclose(out, ref, atol=1e-5, rtol=1e-5)

    print("KERNEL_OK")
</pallas_src>

<mosaic_0001>
module attributes {stable_mosaic.version = 11 : i64} {
  func.func @_linear_kernel(%arg0: i32, %arg1: memref<32x5xf32, #tpu.memory_space<vmem>>, %arg2: memref<5x128xf32, #tpu.memory_space<vmem>>, %arg3: memref<1x128xf32, #tpu.memory_space<vmem>>, %arg4: memref<32x5xf32, #tpu.memory_space<vmem>>) attributes {dimension_semantics = [#tpu.dimension_semantics<parallel>], iteration_bounds = array<i64: 2>, scalar_prefetch = 0 : i64, scratch_operands = 0 : i64, tpu.core_type = #tpu.core_type<tc>, window_params = [{transform_indices = @transform_0, window_bounds = array<i64: 32, 5>}, {pipeline_mode = #tpu.pipeline_mode<synchronous>, transform_indices = @transform_1, window_bounds = array<i64: 5, 128>}, {pipeline_mode = #tpu.pipeline_mode<synchronous>, transform_indices = @transform_2, window_bounds = array<i64: 1, 128>}, {transform_indices = @transform_3, window_bounds = array<i64: 32, 5>}]} {
    %c0 = arith.constant 0 : index
    %c0_0 = arith.constant 0 : index
    %0 = vector.load %arg1[%c0, %c0_0] : memref<32x5xf32, #tpu.memory_space<vmem>>, vector<32x5xf32>
    %c0_1 = arith.constant 0 : index
    %c0_2 = arith.constant 0 : index
    %1 = vector.load %arg2[%c0_1, %c0_2] : memref<5x128xf32, #tpu.memory_space<vmem>>, vector<5x128xf32>
    %cst = arith.constant dense<0.000000e+00> : vector<32x128xf32>
    %2 = tpu.matmul %0, %1, %cst {dimension_numbers = #tpu.dot_dimension_numbers<[1], [0], [0], [1], [0, 0, 1, 1], [], []>} : vector<32x5xf32>, vector<5x128xf32>, vector<32x128xf32> -> vector<32x128xf32>
    %c0_3 = arith.constant 0 : index
    %c0_4 = arith.constant 0 : index
    %3 = vector.load %arg3[%c0_3, %c0_4] : memref<1x128xf32, #tpu.memory_space<vmem>>, vector<1x128xf32>
    %4 = vector.broadcast %3 : vector<1x128xf32> to vector<32x128xf32>
    %5 = arith.addf %2, %4 : vector<32x128xf32>
    %6 = vector.extract_strided_slice %5 {offsets = [0, 0], sizes = [32, 5], strides = [1, 1]} : vector<32x128xf32> to vector<32x5xf32>
    %c0_5 = arith.constant 0 : index
    %c0_6 = arith.constant 0 : index
    %7 = vector.load %arg4[%c0_5, %c0_6] : memref<32x5xf32, #tpu.memory_space<vmem>>, vector<32x5xf32>
    tpu.vector_store %arg4[%c0_5, %c0_6], %6 {strides = array<i32>} : memref<32x5xf32, #tpu.memory_space<vmem>>, vector<32x5xf32>,
    return
  }
  func.func @transform_0(%arg0: i32) -> (i32, i32) {
    %c0_i32 = arith.constant 0 : i32
    %c0_i32_0 = arith.constant 0 : i32
    return %arg0, %c0_i32 : i32, i32
  }
  func.func @transform_1(%arg0: i32) -> (i32, i32) {
    %c0_i32 = arith.constant 0 : i32
    %c0_i32_0 = arith.constant 0 : i32
    %c0_i32_1 = arith.constant 0 : i32
    return %c0_i32, %c0_i32_0 : i32, i32
  }
  func.func @transform_2(%arg0: i32) -> (i32, i32) {
    %c0_i32 = arith.constant 0 : i32
    %c0_i32_0 = arith.constant 0 : i32
    %c0_i32_1 = arith.constant 0 : i32
    return %c0_i32, %c0_i32_0 : i32, i32
  }
  func.func @transform_3(%arg0: i32) -> (i32, i32) {
    %c0_i32 = arith.constant 0 : i32
    %c0_i32_0 = arith.constant 0 : i32
    return %arg0, %c0_i32 : i32, i32
  }
}

</mosaic_0001>

<llo_original>
// kernel: simple_classifier_forward.1
$region0: #{simple_classifier_forward.1}
  #allocation0 [shape = 'u32[]', space=smem, size = 0x4, offset = 0x4, fixed_abs, tag = 'smem constant byte address 0x4 - core index']
  #allocation1 [shape = 'u32[144,128]{1,0:T(1,128)}', space=vmem, size = 0x12000, scoped, tag = 'internal scratch']
  %s0 = inlined_call_operand.vmem [shape: f32[64,5], index: 0, kind: input, shape index: {}]
  %s1 = inlined_call_operand.vmem [shape: f32[5,128], index: 1, kind: input, shape index: {}]
  %s2 = inlined_call_operand.vmem [shape: f32[1,128], index: 2, kind: input, shape index: {}]
  %s3 = inlined_call_operand.vmem [shape: f32[64,5], index: 3, kind: output, shape index: {}]
  %s4 = sld [smem:[#allocation0]]
  $region45: #{simple_classifier_forward.1} parent=0
    _
  %s6 = ssub.s32 1, %s4
  %s7 = scalar_select 0, %s6, %s4
  loop: start=0, step=1, limit=4
  $region2: #{simple_classifier_forward.1} parent=0 // loop_pre_header
    _
  $region3: #{simple_classifier_forward.1} parent=0 // loop_header
    %s9 = sphi 0, %s13
    %p10 = scmp.ge.s32.totalorder %s9, 4
    %s19 = sphi 0, %s21
    %s22 = sphi 0, %s19
    %s23 = sphi 0, %s22
    %s39 = sphi 0, %s23
    %s43 = sphi 0, %s43
    %s45 = sphi 0, %s43
    %s46 = sphi 0, %s45
    %s60 = sphi 0, %s46
    %s64 = sphi 0, %s64
    %s66 = sphi 0, %s64
    %s67 = sphi 0, %s66
    %s81 = sphi 0, %s67
    %s87 = sphi 0, %s89
    %s90 = sphi 0, %s87
    %s91 = sphi 0, %s90
    %s107 = sphi 0, %s91
  $region4: #{simple_classifier_forward.1} parent=0 // loop_header_branch
    %12 = sbr.rel (%p10) target = $region8
  $region5: #{simple_classifier_forward.1} parent=0 // loop_body
    %s14 = ssub.s32 %s9, 1
    %s15 = ssub.s32 %s9, 2
    %s16 = sadd.s32 %s9, 1
    %s17 = ssub.s32 %s9, %s16
    %p18 = scmp.eq.s32.totalorder %s17, 0
    %s20 = sadd.s32 %s19, 1
    %s21 = scalar_select %p18, %s19, %s20
    %p24 = pneg %p18
    %p25 = scmp.eq.s32.totalorder %s9, 1
    %p26 = por %p24, %p25
    %p27 = scmp.ne.s32.totalorder %s19, %s22
    %p28 = scmp.eq.s32.totalorder %s9, 0
    %p29 = por %p27, %p28
    %p30 = scmp.ne.s32.totalorder %s19, %s22
    %p31 = scmp.eq.s32.totalorder %s14, 1
    %p32 = por %p30, %p31
    %p33 = scmp.ne.s32.totalorder %s22, %s23
    %p34 = scmp.eq.s32.totalorder %s14, 0
    %p35 = por %p33, %p34
    %p36 = scmp.ne.s32.totalorder %s22, %s23
    %p37 = scmp.eq.s32.totalorder %s15, 1
    %p38 = por %p36, %p37
    %p40 = scmp.ne.s32.totalorder %s23, %s39
    %p41 = scmp.eq.s32.totalorder %s15, 0
    %p42 = por %p40, %p41
    %s44 = sadd.s32 %s43, 1
    %p47 = scmp.eq.s32.totalorder %s9, 1
    %p48 = scmp.ne.s32.totalorder %s43, %s45
    %p49 = scmp.eq.s32.totalorder %s9, 0
    %p50 = por %p48, %p49
    %p51 = scmp.ne.s32.totalorder %s43, %s45
    %p52 = scmp.eq.s32.totalorder %s14, 1
    %p53 = por %p51, %p52
    %p54 = scmp.ne.s32.totalorder %s45, %s46
    %p55 = scmp.eq.s32.totalorder %s14, 0
    %p56 = por %p54, %p55
    %p57 = scmp.ne.s32.totalorder %s45, %s46
    %p58 = scmp.eq.s32.totalorder %s15, 1
    %p59 = por %p57, %p58
    %p61 = scmp.ne.s32.totalorder %s46, %s60
    %p62 = scmp.eq.s32.totalorder %s15, 0
    %p63 = por %p61, %p62
    %s65 = sadd.s32 %s64, 1
    %p68 = scmp.eq.s32.totalorder %s9, 1
    %p69 = scmp.ne.s32.totalorder %s64, %s66
    %p70 = scmp.eq.s32.totalorder %s9, 0
    %p71 = por %p69, %p70
    %p72 = scmp.ne.s32.totalorder %s64, %s66
    %p73 = scmp.eq.s32.totalorder %s14, 1
    %p74 = por %p72, %p73
    %p75 = scmp.ne.s32.totalorder %s66, %s67
    %p76 = scmp.eq.s32.totalorder %s14, 0
    %p77 = por %p75, %p76
    %p78 = scmp.ne.s32.totalorder %s66, %s67
    %p79 = scmp.eq.s32.totalorder %s15, 1
    %p80 = por %p78, %p79
    %p82 = scmp.ne.s32.totalorder %s67, %s81
    %p83 = scmp.eq.s32.totalorder %s15, 0
    %p84 = por %p82, %p83
    %s85 = ssub.s32 %s9, %s16
    %p86 = scmp.eq.s32.totalorder %s85, 0
    %s88 = sadd.s32 %s87, 1
    %s89 = scalar_select %p86, %s87, %s88
    %p92 = pneg %p86
    %p93 = scmp.eq.s32.totalorder %s9, 1
    %p94 = por %p92, %p93
    %p95 = scmp.ne.s32.totalorder %s87, %s90
    %p96 = scmp.eq.s32.totalorder %s9, 0
    %p97 = por %p95, %p96
    %p98 = scmp.ne.s32.totalorder %s87, %s90
    %p99 = scmp.eq.s32.totalorder %s14, 1
    %p100 = por %p98, %p99
    %p101 = scmp.ne.s32.totalorder %s90, %s91
    %p102 = scmp.eq.s32.totalorder %s14, 0
    %p103 = por %p101, %p102
    %p104 = scmp.ne.s32.totalorder %s90, %s91
    %p105 = scmp.eq.s32.totalorder %s15, 1
    %p106 = por %p104, %p105
    %p108 = scmp.ne.s32.totalorder %s91, %s107
    %p109 = scmp.eq.s32.totalorder %s15, 0
    %p110 = por %p108, %p109
    %p111 = scmp.le.s32.totalorder 1, %s9
    %p112 = scmp.lt.s32.totalorder %s9, 3
    %p113 = pnand %p111, %p112
    %p114 = pneg %p113
    // Predicated region
    $region9: #{simple_classifier_forward.1} parent=5 // pred_check
      _
    $region10: #{simple_classifier_forward.1} parent=5 // pred_check_branch
      %116 = sbr.rel (%p113) target = $region12
    $region11: #{simple_classifier_forward.1} parent=5 // pred_region
      %s117 = ssub.s32 %s9, 1
      // Predicated region
      $region13: #{simple_classifier_forward.1} parent=11 // pred_check
        %p118 = pneg %p56
      $region14: #{simple_classifier_forward.1} parent=11 // pred_check_branch
        %120 = sbr.rel (%p118) target = $region16
      $region15: #{simple_classifier_forward.1} parent=11 // pred_region
        _
      $region16: #{simple_classifier_forward.1} parent=11 // pred_fallthru
        _
      // Predicated region
      $region17: #{simple_classifier_forward.1} parent=11 // pred_check
        %p121 = pneg %p77
      $region18: #{simple_classifier_forward.1} parent=11 // pred_check_branch
        %123 = sbr.rel (%p121) target = $region20
      $region19: #{simple_classifier_forward.1} parent=11 // pred_region
        _
      $region20: #{simple_classifier_forward.1} parent=11 // pred_fallthru
        _
    $region12: #{simple_classifier_forward.1} parent=5 // pred_fallthru
      _
    %p124 = scmp.lt.s32.totalorder %s9, 2
    // Predicated region
    $region21: #{simple_classifier_forward.1} parent=5 // pred_check
      %p125 = pneg %p124
    $region22: #{simple_classifier_forward.1} parent=5 // pred_check_branch
      %127 = sbr.rel (%p125) target = $region24
    $region23: #{simple_classifier_forward.1} parent=5 // pred_region
      // Predicated region
      $region25: #{simple_classifier_forward.1} parent=23 // pred_check
        %p128 = pneg %p29
      $region26: #{simple_classifier_forward.1} parent=23 // pred_check_branch
        %130 = sbr.rel (%p128) target = $region28
      $region27: #{simple_classifier_forward.1} parent=23 // pred_region
        %s131 = smul.u32 4, %s9
        %p132 = scmp.lt.s32.totalorder %s131, 7
        %s133 = scalar_select %p132, %s131, 7
        %s134 = smul.addr %s133, 8
        %s135 = scalar_lea.vmem %s0, %s134
        %s136 = smul.u32 4, %s9
      $region28: #{simple_classifier_forward.1} parent=23 // pred_fallthru
        _
    $region24: #{simple_classifier_forward.1} parent=5 // pred_fallthru
      _
    %p137 = scmp.le.s32.totalorder 1, %s9
    %p138 = scmp.lt.s32.totalorder %s9, 3
    %p139 = pnand %p137, %p138
    %p140 = pneg %p139
    // Predicated region
    $region29: #{simple_classifier_forward.1} parent=5 // pred_check
      _
    $region30: #{simple_classifier_forward.1} parent=5 // pred_check_branch
      %142 = sbr.rel (%p139) target = $region32
    $region31: #{simple_classifier_forward.1} parent=5 // pred_region
      %s143 = ssub.s32 %s9, 1
      %s144 = smul.u32 4, %s14
      %p145 = scmp.lt.s32.totalorder %s144, 7
      %s146 = scalar_select %p145, %s144, 7
      %s147 = smul.addr %s146, 8
      %s148 = scalar_lea.vmem %s0, %s147
      %p149 = pneg %p35
      %p150 = pneg %p32
      %p151 = pneg %p56
      %p152 = pneg %p53
      %p153 = pneg %p77
      %p154 = pneg %p74
      %p155 = pneg %p103
      %p156 = pneg %p100
      %s157 = smul.u32 4, %s14
      %p158 = scmp.lt.s32.totalorder %s157, 7
      %s159 = scalar_select %p158, %s157, 7
      %s160 = smul.addr %s159, 8
      %s161 = scalar_lea.vmem %s3, %s160
      %s162 = smul.u32 4, %s14
      %p163 = scmp.lt.s32.totalorder %s162, 7
      %s164 = scalar_select %p163, %s162, 7
      %s165 = smul.addr %s164, 8
      %s166 = scalar_lea.vmem %s0, %s165
      %s167 = smul.u32 4, %s14
      %s168 = smul.u32 4, %s14
      %p169 = scmp.lt.s32.totalorder %s168, 7
      %s170 = scalar_select %p169, %s168, 7
      %s171 = smul.addr %s170, 8
      %s172 = scalar_lea.vmem %s3, %s171
      %s173 = smul.u32 4, %s14
      %v174 = vld [vmem:[%s166] sm:$0xff]
      %v175 = vld [vmem:[%s166 + $0x8] sm:$0xff]
      %v176 = vld [vmem:[%s166 + $0x10] sm:$0xff]
      %v177 = vld [vmem:[%s166 + $0x18] sm:$0xff]
      %v178 = vld [vmem:[%s1] sm:$0x1f]
      %v179 = vld [vmem:[%s2] sm:$0x1]
      %v181 = vlaneseq
      %v182 = vshrl.u32 %v181, 7
      %v183 = vsub.s32 0, %v182
      %v184 = vrot.slane %v179, %v183
      %vm186 = vcmask 39936
      %v188 = vsel %vm186, %v174, 0
      %v191 = vsel %vm186, %v175, 0
      %v194 = vsel %vm186, %v176, 0
      %v197 = vsel %vm186, %v177, 0
      %vm199 = vcmask 1044480
      %v201 = vsel %vm199, %v178, 0
      %203 = vmatprep.subr.mxu0 0.0
      %204 = vmatpush1.msra.mxu0 0.0
      %205 = vmatprep.subr.mxu0 0.0
      %206 = vmatpush1.msra.mxu0 0.0
      %207 = vmatprep.subr.mxu0 0.0
      %208 = vmatpush1.msra.mxu0 0.0
      %209 = vmatprep.subr.mxu0 0.0
      %210 = vmatpush1.msra.mxu0 0.0
      %211 = vmatprep.subr.mxu0 0.0
      %212 = vmatpush1.msra.mxu0 0.0
      %213 = vmatprep.subr.mxu0 0.0
      %214 = vmatpush1.msra.mxu0 0.0
      %215 = vmatprep.subr.mxu0 0.0
      %216 = vmatpush1.msra.mxu0 0.0
      %217 = vmatprep.subr.mxu0 0.0
      %218 = vmatpush1.msra.mxu0 0.0
      %219 = vmatprep.subr.mxu0 0.0
      %220 = vmatpush1.msra.mxu0 0.0
      %221 = vmatprep.subr.mxu0 0.0
      %222 = vmatpush1.msra.mxu0 0.0
      %223 = vmatprep.subr.mxu0 0.0
      %224 = vmatpush1.msra.mxu0 0.0
      %225 = vmatprep.subr.mxu0 0.0
      %226 = vmatpush1.msra.mxu0 0.0
      %227 = vmatprep.subr.mxu0 0.0
      %228 = vmatpush1.msra.mxu0 0.0
      %229 = vmatprep.subr.mxu0 0.0
      %230 = vmatpush1.msra.mxu0 0.0
      %231 = vmatprep.subr.mxu0 0.0
      %232 = vmatpush1.msra.mxu0 0.0
      %233 = vmatprep.subr.mxu0 0.0
      %234 = vmatpush1.msra.mxu0 %v201
      %235 = vmatprep.subr.mxu0 0.0
      %236 = vmatpush2.msra.mxu0 0.0
      %237 = vmatprep.subr.mxu0 0.0
      %238 = vmatpush2.msra.mxu0 0.0
      %239 = vmatprep.subr.mxu0 0.0
      %240 = vmatpush2.msra.mxu0 0.0
      %241 = vmatprep.subr.mxu0 0.0
      %242 = vmatpush2.msra.mxu0 0.0
      %243 = vmatprep.subr.mxu0 0.0
      %244 = vmatpush2.msra.mxu0 0.0
      %245 = vmatprep.subr.mxu0 0.0
      %246 = vmatpush2.msra.mxu0 0.0
      %247 = vmatprep.subr.mxu0 0.0
      %248 = vmatpush2.msra.mxu0 0.0
      %249 = vmatprep.subr.mxu0 0.0
      %250 = vmatpush2.msra.mxu0 0.0
      %251 = vmatprep.subr.mxu0 0.0
      %252 = vmatpush2.msra.mxu0 0.0
      %253 = vmatprep.subr.mxu0 0.0
      %254 = vmatpush2.msra.mxu0 0.0
      %255 = vmatprep.subr.mxu0 0.0
      %256 = vmatpush2.msra.mxu0 0.0
      %257 = vmatprep.subr.mxu0 0.0
      %258 = vmatpush2.msra.mxu0 0.0
      %259 = vmatprep.subr.mxu0 0.0
      %260 = vmatpush2.msra.mxu0 0.0
      %261 = vmatprep.subr.mxu0 0.0
      %262 = vmatpush2.msra.mxu0 0.0
      %263 = vmatprep.subr.mxu0 0.0
      %264 = vmatpush2.msra.mxu0 0.0
      %265 = vmatprep.subr.mxu0 0.0
      %266 = vmatpush2.msra.mxu0 0.0
      %267 = vmatprep.mubr.f32.mxu0 0.0
      %268 = vmatmul.mubr.f32.gmra.mxu0 %v188
      %v269 = vpop.f32.mrf.mxu0
      %v270 = vadd.f32 %v184, %v269
      %v271 = vpop.f32.mrf.mxu0
      %272 = vmatprep.mubr.f32.mxu0 0.0
      %273 = vmatmul.mubr.f32.gmra.mxu0 %v191
      %v274 = vpop.f32.mrf.mxu0
      %v275 = vadd.f32 %v184, %v274
      %v276 = vpop.f32.mrf.mxu0
      %277 = vmatprep.mubr.f32.mxu0 0.0
      %278 = vmatmul.mubr.f32.gmra.mxu0 %v194
      %v279 = vpop.f32.mrf.mxu0
      %v280 = vadd.f32 %v184, %v279
      %v281 = vpop.f32.mrf.mxu0
      %282 = vmatprep.mubr.f32.mxu0 0.0
      %283 = vmatmul.mubr.f32.gmra.mxu0 %v197
      %v284 = vpop.f32.mrf.mxu0
      %v285 = vadd.f32 %v184, %v284
      %v286 = vpop.f32.mrf.mxu0
      %287 = vdwg.mxu0
      %288 = vst.msk [vmem:[%s172] sm:$0xff] %vm186, %v270
      %289 = vst.msk [vmem:[%s172 + $0x8] sm:$0xff] %vm186, %v275
      %290 = vst.msk [vmem:[%s172 + $0x10] sm:$0xff] %vm186, %v280
      %291 = vst.msk [vmem:[%s172 + $0x18] sm:$0xff] %vm186, %v285
      %s292 = smul.u32 4, %s14
      %p293 = scmp.lt.s32.totalorder %s292, 7
      %s294 = scalar_select %p293, %s292, 7
      %s295 = smul.addr %s294, 8
      %s296 = scalar_lea.vmem %s3, %s295
      // Predicated region
      $region33: #{simple_classifier_forward.1} parent=31 // pred_check
        %p297 = pneg %p100
      $region34: #{simple_classifier_forward.1} parent=31 // pred_check_branch
        %299 = sbr.rel (%p297) target = $region36
      $region35: #{simple_classifier_forward.1} parent=31 // pred_region
        %s300 = smul.u32 4, %s14
      $region36: #{simple_classifier_forward.1} parent=31 // pred_fallthru
        _
    $region32: #{simple_classifier_forward.1} parent=5 // pred_fallthru
      _
    %p301 = scmp.le.s32.totalorder 2, %s9
    // Predicated region
    $region37: #{simple_classifier_forward.1} parent=5 // pred_check
      %p302 = pneg %p301
    $region38: #{simple_classifier_forward.1} parent=5 // pred_check_branch
      %304 = sbr.rel (%p302) target = $region40
    $region39: #{simple_classifier_forward.1} parent=5 // pred_region
      %s305 = ssub.s32 %s9, 2
      // Predicated region
      $region41: #{simple_classifier_forward.1} parent=39 // pred_check
        %p306 = pneg %p106
      $region42: #{simple_classifier_forward.1} parent=39 // pred_check_branch
        %308 = sbr.rel (%p306) target = $region44
      $region43: #{simple_classifier_forward.1} parent=39 // pred_region
        %s309 = smul.u32 4, %s15
        %p310 = scmp.lt.s32.totalorder %s309, 7
        %s311 = scalar_select %p310, %s309, 7
        %s312 = smul.addr %s311, 8
        %s313 = scalar_lea.vmem %s3, %s312
      $region44: #{simple_classifier_forward.1} parent=39 // pred_fallthru
        _
    $region40: #{simple_classifier_forward.1} parent=5 // pred_fallthru
      _
  $region6: #{simple_classifier_forward.1} parent=0 // loop_footer
    %s13 = sadd.s32 1, %s9
  $region7: #{simple_classifier_forward.1} parent=0 // loop_footer_branch
    %8 = sbr.rel target = $region3
  $region8: #{simple_classifier_forward.1} parent=0 // loop_exit
    _

</llo_original>
